<compile_context>
chip_gen: v7x
topology: tpu7x:2x2x1
jax: 0.10.0
libtpu: 0.0.40
codegen_flags: <defaults>
</compile_context>

<pallas_src>
import jax
import jax.numpy as jnp
from jax import lax
from jax.experimental import pallas as pl
from jax.experimental.pallas import tpu as pltpu

_EPS = 1e-12           # F.normalize default eps
_EPS2 = _EPS * _EPS    # max(sqrt(x), eps) == sqrt(max(x, eps^2))


def _cdiv(a, b):
    return -(-a // b)


def _round_up(x, m):
    return _cdiv(x, m) * m


def _round_down(x, m):
    return (x // m) * m


def _tpu_config():
    """Best-effort hardware probe: (vmem_capacity_bytes, is_v7x_like)."""
    kind = ""
    try:
        kind = jax.devices()[0].device_kind.lower()
    except Exception:
        pass
    is_v7x = ("v7" in kind) or ("tpu7" in kind)
    vmem = None
    try:
        vmem = getattr(pltpu.get_tpu_info(), "vmem_capacity_bytes", None)
    except Exception:
        vmem = None
    if vmem is None:
        if is_v7x:
            vmem = 64 << 20
        elif any(g in kind for g in ("v4", "v5", "v6")):
            vmem = 128 << 20
        elif any(g in kind for g in ("v2", "v3")):
            vmem = 16 << 20
        else:
            vmem = 64 << 20          # conservative default when unknown
    return vmem, is_v7x


def _make_vpu_kernel(d, dt, mask_tail):
    """Row-wise partial sums (p.t, p.p, t.t) on the VPU, f32 accumulators."""

    def kernel(p_ref, t_ref, cos_ref, dot_acc, pp_acc, tt_acc):
        k = pl.program_id(1)
        last = pl.num_programs(1) - 1

        @pl.when(k == 0)
        def _():
            dot_acc[...] = jnp.zeros_like(dot_acc)
            pp_acc[...] = jnp.zeros_like(pp_acc)
            tt_acc[...] = jnp.zeros_like(tt_acc)

        p = p_ref[...].astype(jnp.float32)
        t = t_ref[...].astype(jnp.float32)

        def accumulate(pv, tv):
            dot_acc[...] += jnp.sum(pv * tv, axis=-1, keepdims=True)
            pp_acc[...] += jnp.sum(pv * pv, axis=-1, keepdims=True)
            tt_acc[...] += jnp.sum(tv * tv, axis=-1, keepdims=True)

        if mask_tail:
            # Only the last feature tile has out-of-bounds lanes; keep the hot
            # path select-free and mask only that tile.
            @pl.when(k != last)
            def _():
                accumulate(p, t)

            @pl.when(k == last)
            def _():
                lane = lax.broadcasted_iota(jnp.int32, p.shape, dimension=1)
                valid = (k * dt + lane) < d
                accumulate(jnp.where(valid, p, 0.0), jnp.where(valid, t, 0.0))
        else:
            accumulate(p, t)

        @pl.when(k == last)
        def _():
            # rsqrt runs on the EUP slot; max(.., eps^2) exactly matches
            # F.normalize's clamp_min(||x||, eps).
            inv_p = lax.rsqrt(jnp.maximum(pp_acc[...], _EPS2))
            inv_t = lax.rsqrt(jnp.maximum(tt_acc[...], _EPS2))
            cos_ref[...] = dot_acc[...] * inv_p * inv_t

    return kernel


def _make_mxu_kernel(bt, d, dt, mask_tail):
    """MXU-offloaded reductions (v7x bf16/fp8 path).

    Accumulates gram = [P;T] @ [P;T]^T in f32 across feature tiles; pp/pt/tt
    are the diagonals of its quadrants.  Keeps the VPU nearly idle (no f32
    casts, no multiply/add trees), which on v7x (3.2 TB/s HBM) is what would
    otherwise saturate before the HBM roofline.
    """

    def kernel(p_ref, t_ref, cos_ref, gram_acc):
        k = pl.program_id(1)
        last = pl.num_programs(1) - 1

        @pl.when(k == 0)
        def _():
            gram_acc[...] = jnp.zeros_like(gram_acc)

        s = jnp.concatenate([p_ref[...], t_ref[...]], axis=0)   # (2*bt, dt)

        def accumulate(sv):
            gram_acc[...] += lax.dot_general(
                sv, sv,
                dimension_numbers=(((1,), (1,)), ((), ())),
                preferred_element_type=jnp.float32)

        if mask_tail:
            @pl.when(k != last)
            def _():
                accumulate(s)

            @pl.when(k == last)
            def _():
                lane = lax.broadcasted_iota(jnp.int32, s.shape, dimension=1)
                valid = (k * dt + lane) < d
                accumulate(jnp.where(valid, s, jnp.zeros_like(s)))
        else:
            accumulate(s)

        @pl.when(k == last)
        def _():
            g = gram_acc[...]                                   # (2*bt, 2*bt) f32
            row = lax.broadcasted_iota(jnp.int32, g.shape, 0)
            col = lax.broadcasted_iota(jnp.int32, g.shape, 1)
            top = row < bt
            pp_m = top & (col == row)            # g[i, i],        i < bt
            pt_m = top & (col == row + bt)       # g[i, bt + i],   i < bt
            tt_m = (~top) & (col == row)         # g[bt+i, bt+i]
            # where (not multiply) so NaN/Inf garbage from ragged-batch rows in
            # off-diagonal entries cannot leak into valid rows.
            pp = jnp.sum(jnp.where(pp_m, g, 0.0), axis=1, keepdims=True)[:bt]
            pt = jnp.sum(jnp.where(pt_m, g, 0.0), axis=1, keepdims=True)[:bt]
            tt = jnp.sum(jnp.where(tt_m, g, 0.0), axis=1, keepdims=True)[bt:]
            inv_p = lax.rsqrt(jnp.maximum(pp, _EPS2))
            inv_t = lax.rsqrt(jnp.maximum(tt, _EPS2))
            cos_ref[...] = pt * inv_p * inv_t

    return kernel


def _pick_bt(b, sublane, target, min_tiles):
    """Batch tile: a multiple of the dtype's sublane pack (or the full batch
    when smaller than one pack); on multi-TensorCore chips keep >= `min_tiles`
    tiles on the 'parallel' axis so both cores get work."""
    if b < sublane:
        return b                                  # single full-dim tile
    bt = max(sublane, min(_round_down(target, sublane), _round_down(b, sublane)))
    if min_tiles > 1 and _cdiv(b, bt) < min_tiles:
        bt = max(sublane, _round_up(_cdiv(b, min_tiles), sublane))
        bt = min(bt, _round_down(b, sublane))
    return bt


def cosine_loss(predictions, targets, *, block_budget_bytes=None,
                vmem_limit_bytes=None, use_mxu_reduction=None,
                max_batch_tile=256):
    """mean(1 - cosine_similarity(predictions.reshape(B,-1), targets.reshape(B,-1)))."""
    b = predictions.shape[0]
    p2 = predictions.reshape(b, -1)               # native dtype; no wrapper upcast
    t2 = targets.reshape(b, -1)
    d = p2.shape[1]
    assert t2.shape == (b, d), (p2.shape, t2.shape)

    isz_p = jnp.dtype(p2.dtype).itemsize
    isz_t = jnp.dtype(t2.dtype).itemsize
    sublane = max(8, 32 // min(isz_p, isz_t))     # 8 f32 / 16 bf16 / 32 int8-fp8

    vmem_cap, is_v7x = _tpu_config()
    if vmem_limit_bytes is None:
        vmem_limit_bytes = int(vmem_cap * 3 // 4)  # ~96 MiB on 128-MiB parts, 48 MiB on v7x
    if use_mxu_reduction is None:
        # v7x: for <=16-bit inputs the VPU (casts + 3 muls + reduce adds), not
        # HBM, saturates first -> offload the reduction to the idle MXU.
        use_mxu_reduction = is_v7x and min(isz_p, isz_t) <= 2

    # Per-block element budget so that (2 inputs x 2 pipeline buffers) plus
    # in-kernel temporaries stay comfortably under vmem_limit_bytes.
    if block_budget_bytes is not None:
        elem_budget = max(8 * 128, block_budget_bytes // max(isz_p, isz_t))
    else:
        if use_mxu_reduction:
            per_elem = 4 * (isz_p + isz_t)              # buffers + concat/mask copy
        else:
            casts = 8 if min(isz_p, isz_t) < 4 else 0   # f32 copies of both tiles
            per_elem = 2 * (isz_p + isz_t) + casts + 8  # buffers + products
        elem_budget = max(8 * 128, vmem_limit_bytes // per_elem)

    min_batch_tiles = 2 if is_v7x else 1          # keep both v7x TensorCores busy
    bt_cap = min(max_batch_tile, 128) if use_mxu_reduction else max_batch_tile
    bt = _pick_bt(b, sublane, bt_cap, min_batch_tiles)

    # Feature tile: largest multiple of 128 within the element budget, never
    # larger than the array (ragged tail handled by the in-kernel lane mask).
    if d <= 128:
        dt = d
    else:
        dt = max(128, min(_round_down(elem_budget // bt, 128), _round_down(d, 128)))

    # If the whole feature dim fits in one tile and budget is left over, grow
    # the batch tile instead (amortizes the ~0.35us per-grid-step overhead).
    if _cdiv(d, dt) == 1 and b > sublane and not use_mxu_reduction:
        grow = min(elem_budget // max(dt, 1), 2048, _round_down(b, sublane))
        if min_batch_tiles > 1:
            grow = min(grow, _round_up(_cdiv(b, min_batch_tiles), sublane))
        grow = _round_down(grow, sublane)
        if grow > bt:
            bt = grow

    grid_b = _cdiv(b, bt)
    grid_k = _cdiv(d, dt)
    mask_tail = (d % dt) != 0

    if use_mxu_reduction:
        kernel = _make_mxu_kernel(bt, d, dt, mask_tail)
        scratch = [pltpu.VMEM((2 * bt, 2 * bt), jnp.float32)]   # Gram accumulator
    else:
        kernel = _make_vpu_kernel(d, dt, mask_tail)
        scratch = [pltpu.VMEM((bt, 1), jnp.float32),            # sum(p*t)
                   pltpu.VMEM((bt, 1), jnp.float32),            # sum(p*p)
                   pltpu.VMEM((bt, 1), jnp.float32)]            # sum(t*t)

    cos = pl.pallas_call(
        kernel,
        out_shape=jax.ShapeDtypeStruct((b, 1), jnp.float32),
        grid_spec=pltpu.PrefetchScalarGridSpec(
            num_scalar_prefetch=0,
            grid=(grid_b, grid_k),
            in_specs=[
                # TODO(synk): if profiling on v5e shows exposed DMA, sweep
                # pipeline_mode=pl.Buffered(3) on these two input specs.
                pl.BlockSpec((bt, dt), lambda i, k: (i, k)),
                pl.BlockSpec((bt, dt), lambda i, k: (i, k)),
            ],
            out_specs=pl.BlockSpec((bt, 1), lambda i, k: (i, 0)),
            scratch_shapes=scratch,
        ),
        compiler_params=pltpu.CompilerParams(
            dimension_semantics=("parallel", "arbitrary"),
            vmem_limit_bytes=int(vmem_limit_bytes),
        ),
    )(p2, t2)

    # Tiny epilogue in plain JAX: mean(1 - cos) over the batch.
    return jnp.mean(1.0 - cos[:, 0])


def _cosine_loss_ref(predictions, targets):
    b = predictions.shape[0]
    p = predictions.reshape(b, -1).astype(jnp.float32)
    t = targets.reshape(b, -1).astype(jnp.float32)
    p = p / jnp.maximum(jnp.linalg.norm(p, axis=-1, keepdims=True), _EPS)
    t = t / jnp.maximum(jnp.linalg.norm(t, axis=-1, keepdims=True), _EPS)
    return jnp.mean(1.0 - jnp.sum(p * t, axis=-1))


if __name__ == "__main__":
    key = jax.random.PRNGKey(0)
    kp, kt = jax.random.split(key)

    # 1) Small f32 NCHW (the module's typical use): batch=2, channels=4, 16x16.
    preds = jax.random.normal(kp, (2, 4, 16, 16), dtype=jnp.float32)
    targs = jax.random.normal(kt, (2, 4, 16, 16), dtype=jnp.float32)
    loss = cosine_loss(preds, targs)
    jax.block_until_ready(loss)
    ref = _cosine_loss_ref(preds, targs)
    assert jnp.allclose(loss, ref, atol=1e-5, rtol=1e-5), (loss, ref)

    # 2) f32, ragged batch (10) and ragged feature dim (5*15*15 = 1125) with a
    #    small block budget: multi-step feature reduction + in-kernel tail mask
    #    + ragged last batch tile, with no jnp.pad anywhere.
    preds2 = jax.random.normal(kp, (10, 5, 15, 15), dtype=jnp.float32)
    targs2 = jax.random.normal(kt, (10, 5, 15, 15), dtype=jnp.float32)
    loss2 = cosine_loss(preds2, targs2, block_budget_bytes=32 * 1024)
    jax.block_until_ready(loss2)
    ref2 = _cosine_loss_ref(preds2, targs2)
    assert jnp.allclose(loss2, ref2, atol=1e-5, rtol=1e-5), (loss2, ref2)

    # 3) bf16, VPU path, multi-step feature reduction (no upcast over HBM).
    preds3 = jax.random.normal(kp, (16, 8, 16, 16), jnp.float32).astype(jnp.bfloat16)
    targs3 = jax.random.normal(kt, (16, 8, 16, 16), jnp.float32).astype(jnp.bfloat16)
    loss3 = cosine_loss(preds3, targs3, block_budget_bytes=16 * 1024,
                        use_mxu_reduction=False)
    jax.block_until_ready(loss3)
    ref3 = _cosine_loss_ref(preds3, targs3)
    assert jnp.allclose(loss3, ref3, atol=1e-3, rtol=1e-3), (loss3, ref3)

    # 4) bf16, forced MXU/Gram reduction (the v7x default path) with a ragged
    #    feature dim, so that branch is exercised on any TPU generation.
    preds4 = jax.random.normal(kp, (16, 5, 15, 15), jnp.float32).astype(jnp.bfloat16)
    targs4 = jax.random.normal(kt, (16, 5, 15, 15), jnp.float32).astype(jnp.bfloat16)
    loss4 = cosine_loss(preds4, targs4, block_budget_bytes=16 * 1024,
                        use_mxu_reduction=True)
    jax.block_until_ready(loss4)
    ref4 = _cosine_loss_ref(preds4, targs4)
    assert jnp.allclose(loss4, ref4, atol=1e-3, rtol=1e-3), (loss4, ref4)

    print("KERNEL_OK")
</pallas_src>

<mosaic_0001>
module attributes {stable_mosaic.version = 11 : i64} {
  func.func @kernel(%arg0: i32, %arg1: i32, %arg2: memref<2x1024xf32, #tpu.memory_space<vmem>>, %arg3: memref<2x1024xf32, #tpu.memory_space<vmem>>, %arg4: memref<2x1xf32, #tpu.memory_space<vmem>>, %arg5: memref<2x1xf32, #tpu.memory_space<vmem>>, %arg6: memref<2x1xf32, #tpu.memory_space<vmem>>, %arg7: memref<2x1xf32, #tpu.memory_space<vmem>>) attributes {dimension_semantics = [#tpu.dimension_semantics<parallel>, #tpu.dimension_semantics<arbitrary>], iteration_bounds = array<i64: 1, 1>, scalar_prefetch = 0 : i64, scratch_operands = 3 : i64, tpu.core_type = #tpu.core_type<tc>, window_params = [{transform_indices = @transform_0, window_bounds = array<i64: 2, 1024>}, {transform_indices = @transform_1, window_bounds = array<i64: 2, 1024>}, {transform_indices = @transform_2, window_bounds = array<i64: 2, 1>}]} {
    %c0_i32 = arith.constant 0 : i32
    %0 = arith.cmpi eq, %arg1, %c0_i32 : i32
    %1 = arith.extui %0 : i1 to i32
    %c0_i32_0 = arith.constant 0 : i32
    %2 = arith.cmpi ne, %1, %c0_i32_0 : i32
    scf.if %2 {
      %cst_20 = arith.constant 0.000000e+00 : f32
      %26 = vector.broadcast %cst_20 : f32 to vector<2x1xf32>
      %c0_21 = arith.constant 0 : index
      %c0_22 = arith.constant 0 : index
      %27 = vector.load %arg5[%c0_21, %c0_22] : memref<2x1xf32, #tpu.memory_space<vmem>>, vector<2x1xf32>
      tpu.vector_store %arg5[%c0_21, %c0_22], %26 {strides = array<i32>} : memref<2x1xf32, #tpu.memory_space<vmem>>, vector<2x1xf32>,
      %cst_23 = arith.constant 0.000000e+00 : f32
      %28 = vector.broadcast %cst_23 : f32 to vector<2x1xf32>
      %c0_24 = arith.constant 0 : index
      %c0_25 = arith.constant 0 : index
      %29 = vector.load %arg6[%c0_24, %c0_25] : memref<2x1xf32, #tpu.memory_space<vmem>>, vector<2x1xf32>
      tpu.vector_store %arg6[%c0_24, %c0_25], %28 {strides = array<i32>} : memref<2x1xf32, #tpu.memory_space<vmem>>, vector<2x1xf32>,
      %cst_26 = arith.constant 0.000000e+00 : f32
      %30 = vector.broadcast %cst_26 : f32 to vector<2x1xf32>
      %c0_27 = arith.constant 0 : index
      %c0_28 = arith.constant 0 : index
      %31 = vector.load %arg7[%c0_27, %c0_28] : memref<2x1xf32, #tpu.memory_space<vmem>>, vector<2x1xf32>
      tpu.vector_store %arg7[%c0_27, %c0_28], %30 {strides = array<i32>} : memref<2x1xf32, #tpu.memory_space<vmem>>, vector<2x1xf32>,
    } else {
    }
    %c0 = arith.constant 0 : index
    %c0_1 = arith.constant 0 : index
    %3 = vector.load %arg2[%c0, %c0_1] : memref<2x1024xf32, #tpu.memory_space<vmem>>, vector<2x1024xf32>
    %c0_2 = arith.constant 0 : index
    %c0_3 = arith.constant 0 : index
    %4 = vector.load %arg3[%c0_2, %c0_3] : memref<2x1024xf32, #tpu.memory_space<vmem>>, vector<2x1024xf32>
    %c0_4 = arith.constant 0 : index
    %c0_5 = arith.constant 0 : index
    %5 = vector.load %arg5[%c0_4, %c0_5] : memref<2x1xf32, #tpu.memory_space<vmem>>, vector<2x1xf32>
    %6 = arith.mulf %3, %4 : vector<2x1024xf32>
    %cst = arith.constant dense<0.000000e+00> : vector<2xf32>
    %7 = vector.multi_reduction <add>, %6, %cst [1] : vector<2x1024xf32> to vector<2xf32>
    %8 = vector.shape_cast %7 : vector<2xf32> to vector<2x1xf32>
    %9 = arith.addf %5, %8 : vector<2x1xf32>
    %c0_6 = arith.constant 0 : index
    %c0_7 = arith.constant 0 : index
    %10 = vector.load %arg5[%c0_6, %c0_7] : memref<2x1xf32, #tpu.memory_space<vmem>>, vector<2x1xf32>
    tpu.vector_store %arg5[%c0_6, %c0_7], %9 {strides = array<i32>} : memref<2x1xf32, #tpu.memory_space<vmem>>, vector<2x1xf32>,
    %c0_8 = arith.constant 0 : index
    %c0_9 = arith.constant 0 : index
    %11 = vector.load %arg6[%c0_8, %c0_9] : memref<2x1xf32, #tpu.memory_space<vmem>>, vector<2x1xf32>
    %12 = arith.mulf %3, %3 : vector<2x1024xf32>
    %cst_10 = arith.constant dense<0.000000e+00> : vector<2xf32>
    %13 = vector.multi_reduction <add>, %12, %cst_10 [1] : vector<2x1024xf32> to vector<2xf32>
    %14 = vector.shape_cast %13 : vector<2xf32> to vector<2x1xf32>
    %15 = arith.addf %11, %14 : vector<2x1xf32>
    %c0_11 = arith.constant 0 : index
    %c0_12 = arith.constant 0 : index
    %16 = vector.load %arg6[%c0_11, %c0_12] : memref<2x1xf32, #tpu.memory_space<vmem>>, vector<2x1xf32>
    tpu.vector_store %arg6[%c0_11, %c0_12], %15 {strides = array<i32>} : memref<2x1xf32, #tpu.memory_space<vmem>>, vector<2x1xf32>,
    %c0_13 = arith.constant 0 : index
    %c0_14 = arith.constant 0 : index
    %17 = vector.load %arg7[%c0_13, %c0_14] : memref<2x1xf32, #tpu.memory_space<vmem>>, vector<2x1xf32>
    %18 = arith.mulf %4, %4 : vector<2x1024xf32>
    %cst_15 = arith.constant dense<0.000000e+00> : vector<2xf32>
    %19 = vector.multi_reduction <add>, %18, %cst_15 [1] : vector<2x1024xf32> to vector<2xf32>
    %20 = vector.shape_cast %19 : vector<2xf32> to vector<2x1xf32>
    %21 = arith.addf %17, %20 : vector<2x1xf32>
    %c0_16 = arith.constant 0 : index
    %c0_17 = arith.constant 0 : index
    %22 = vector.load %arg7[%c0_16, %c0_17] : memref<2x1xf32, #tpu.memory_space<vmem>>, vector<2x1xf32>
    tpu.vector_store %arg7[%c0_16, %c0_17], %21 {strides = array<i32>} : memref<2x1xf32, #tpu.memory_space<vmem>>, vector<2x1xf32>,
    %c0_i32_18 = arith.constant 0 : i32
    %23 = arith.cmpi eq, %arg1, %c0_i32_18 : i32
    %24 = arith.extui %23 : i1 to i32
    %c0_i32_19 = arith.constant 0 : i32
    %25 = arith.cmpi ne, %24, %c0_i32_19 : i32
    scf.if %25 {
      %c0_20 = arith.constant 0 : index
      %c0_21 = arith.constant 0 : index
      %26 = vector.load %arg6[%c0_20, %c0_21] : memref<2x1xf32, #tpu.memory_space<vmem>>, vector<2x1xf32>
      %cst_22 = arith.constant 1.000000e-24 : f32
      %27 = vector.broadcast %cst_22 : f32 to vector<2x1xf32>
      %28 = arith.maximumf %26, %27 : vector<2x1xf32>
      %29 = math.rsqrt %28 : vector<2x1xf32>
      %c0_23 = arith.constant 0 : index
      %c0_24 = arith.constant 0 : index
      %30 = vector.load %arg7[%c0_23, %c0_24] : memref<2x1xf32, #tpu.memory_space<vmem>>, vector<2x1xf32>
      %cst_25 = arith.constant 1.000000e-24 : f32
      %31 = vector.broadcast %cst_25 : f32 to vector<2x1xf32>
      %32 = arith.maximumf %30, %31 : vector<2x1xf32>
      %33 = math.rsqrt %32 : vector<2x1xf32>
      %c0_26 = arith.constant 0 : index
      %c0_27 = arith.constant 0 : index
      %34 = vector.load %arg5[%c0_26, %c0_27] : memref<2x1xf32, #tpu.memory_space<vmem>>, vector<2x1xf32>
      %35 = arith.mulf %34, %29 : vector<2x1xf32>
      %36 = arith.mulf %35, %33 : vector<2x1xf32>
      %c0_28 = arith.constant 0 : index
      %c0_29 = arith.constant 0 : index
      %37 = vector.load %arg4[%c0_28, %c0_29] : memref<2x1xf32, #tpu.memory_space<vmem>>, vector<2x1xf32>
      tpu.vector_store %arg4[%c0_28, %c0_29], %36 {strides = array<i32>} : memref<2x1xf32, #tpu.memory_space<vmem>>, vector<2x1xf32>,
    } else {
    }
    return
  }
  func.func @transform_0(%arg0: i32, %arg1: i32) -> (i32, i32) {
    %c0_i32 = arith.constant 0 : i32
    return %arg0, %arg1 : i32, i32
  }
  func.func @transform_1(%arg0: i32, %arg1: i32) -> (i32, i32) {
    %c0_i32 = arith.constant 0 : i32
    return %arg0, %arg1 : i32, i32
  }
  func.func @transform_2(%arg0: i32, %arg1: i32) -> (i32, i32) {
    %c0_i32 = arith.constant 0 : i32
    %c0_i32_0 = arith.constant 0 : i32
    return %arg0, %c0_i32 : i32, i32
  }
}

</mosaic_0001>

<llo_original>
// kernel: tpu_custom_call.1
$region0: #{tpu_custom_call.1}
  #allocation0 [shape = 'u32[]', space=smem, size = 0x4, offset = 0x4, fixed_abs, tag = 'smem constant byte address 0x4 - core index']
  #allocation1 [shape = 'u32[144,128]{1,0:T(1,128)}', space=vmem, size = 0x12000, scoped, tag = 'internal scratch']
  #allocation2 [shape = 'f32[2,1]{1,0:T(2,128)}', space=vmem, size = 0x400, scoped, tag = 'scratch operand']
  #allocation3 [shape = 'f32[2,1]{1,0:T(2,128)}', space=vmem, size = 0x400, scoped, tag = 'scratch operand']
  #allocation4 [shape = 'f32[2,1]{1,0:T(2,128)}', space=vmem, size = 0x400, scoped, tag = 'scratch operand']
  %s0 = inlined_call_operand.hbm [shape: f32[2,1024], index: 0, kind: input, shape index: {}]
  %s1 = inlined_call_operand.hbm [shape: f32[2,1024], index: 1, kind: input, shape index: {}]
  %s2 = inlined_call_operand.vmem [shape: f32[2,1], index: 2, kind: output, shape index: {}]
  %s3 = sld [smem:[#allocation0]]
  $region34: #{tpu_custom_call.1} parent=0
    _
  %s5 = ssub.s32 1, %s3
  %s6 = scalar_select 0, %s5, %s3
  $region1: #{tpu_custom_call.1} parent=0
    #allocation5 [shape = 'u8[8192]{0}', space=vmem, size = 0x2000, scoped, tag = 'input window, operand 0, single buffered']
    #allocation6 [shape = 's32[1]{0}', space=sflag, size = 0x4, scoped, tag = 'scoped memory for tpu_custom_call.1']
    #allocation7 [shape = 'u8[8192]{0}', space=vmem, size = 0x2000, scoped, tag = 'input window, operand 1, single buffered']
    #allocation8 [shape = 's32[1]{0}', space=sflag, size = 0x4, scoped, tag = 'scoped memory for tpu_custom_call.1']
    %7 = vsyncpa [#allocation6], 0
    %8 = vsyncpa [#allocation8], 0
    // Predicated region
    $region2: #{tpu_custom_call.1} parent=1 // pred_check
      _
    $region3: #{tpu_custom_call.1} parent=1 // pred_check_branch
      %10 = sbr.rel (0) target = $region5
    $region4: #{tpu_custom_call.1} parent=1 // pred_region
      %s12 = ssub.s32 256, 256
      %13 = vsyncadd [#allocation6], %s12
      %s15 = sshll.u32 [#allocation5], 4
      %s16 = int_to_ptr.vmem [resolvable:$true] %s15
      %18 = dma.hbm_to_vmem [thread:$0]  %s0, 256, %s16, [#allocation6]
    $region5: #{tpu_custom_call.1} parent=1 // pred_fallthru
      _
    // Predicated region
    $region6: #{tpu_custom_call.1} parent=1 // pred_check
      _
    $region7: #{tpu_custom_call.1} parent=1 // pred_check_branch
      %20 = sbr.rel (0) target = $region9
    $region8: #{tpu_custom_call.1} parent=1 // pred_region
      %s22 = ssub.s32 256, 256
      %23 = vsyncadd [#allocation8], %s22
      %s25 = sshll.u32 [#allocation7], 4
      %s26 = int_to_ptr.vmem [resolvable:$true] %s25
      %28 = dma.hbm_to_vmem [thread:$0]  %s1, 256, %s26, [#allocation8]
    $region9: #{tpu_custom_call.1} parent=1 // pred_fallthru
      _
    // Predicated region
    $region10: #{tpu_custom_call.1} parent=1 // pred_check
      _
    $region11: #{tpu_custom_call.1} parent=1 // pred_check_branch
      %30 = sbr.rel (0) target = $region13
    $region12: #{tpu_custom_call.1} parent=1 // pred_region
      %31 = dma.done [#allocation6], 256
    $region13: #{tpu_custom_call.1} parent=1 // pred_fallthru
      _
    // Predicated region
    $region14: #{tpu_custom_call.1} parent=1 // pred_check
      _
    $region15: #{tpu_custom_call.1} parent=1 // pred_check_branch
      %33 = sbr.rel (0) target = $region17
    $region16: #{tpu_custom_call.1} parent=1 // pred_region
      %34 = dma.done [#allocation8], 256
    $region17: #{tpu_custom_call.1} parent=1 // pred_fallthru
      _
    %p35 = scmp.eq.s32.totalorder 0, 0
    // Predicated region
    $region18: #{tpu_custom_call.1} parent=1 // pred_check
      %p36 = pneg %p35
    $region19: #{tpu_custom_call.1} parent=1 // pred_check_branch
      %38 = sbr.rel (%p36) target = $region21
    $region20: #{tpu_custom_call.1} parent=1 // pred_region
      %vm39 = vcmask 1024
      %40 = vst.msk [vmem:[#allocation2] sm:$0x3] %vm39, 0.0
      %41 = vst.msk [vmem:[#allocation3] sm:$0x3] %vm39, 0.0
      %42 = vst.msk [vmem:[#allocation4] sm:$0x3] %vm39, 0.0
    $region21: #{tpu_custom_call.1} parent=1 // pred_fallthru
      _
    %v43 = vld [vmem:[#allocation5] sm:$0xff]
    %v44 = vld [vmem:[#allocation5 + $0x8] sm:$0xff]
    %v45 = vld [vmem:[#allocation7] sm:$0xff]
    %v46 = vld [vmem:[#allocation7 + $0x8] sm:$0xff]
    %v47 = vld [vmem:[#allocation2] sm:$0x3]
    %v48 = vmul.f32 %v43, %v45
    %v49 = vmul.f32 %v44, %v46
    %v52 = vcombine.high %v48, %v48
    %v54 = vunpack.c.l.s4 1983009808
    %v55 = vunpack.c.0.s8 %v54
    %v56 = vlaneseq
    %v57 = vshrl.u32 %v56, 7
    %v58 = vsub.s32 %v55, %v57
    %v59 = vrot.slane %v48, %v58
    %v61 = vunpack.c.l.s4 1983009808
    %v62 = vunpack.c.0.s8 %v61
    %v63 = vlaneseq
    %v64 = vshrl.u32 %v63, 7
    %v65 = vsub.s32 %v62, %v64
    %v66 = vrot.slane %v52, %v65
    %v67 = vcombine.high %v59, %v59
    %v68 = vcombine.high %v66, %v66
    %v69 = vcombine.high %v49, %v49
    %v71 = vunpack.c.l.s4 1983009808
    %v72 = vunpack.c.0.s8 %v71
    %v73 = vlaneseq
    %v74 = vshrl.u32 %v73, 7
    %v75 = vsub.s32 %v72, %v74
    %v76 = vrot.slane %v49, %v75
    %v78 = vunpack.c.l.s4 1983009808
    %v79 = vunpack.c.0.s8 %v78
    %v80 = vlaneseq
    %v81 = vshrl.u32 %v80, 7
    %v82 = vsub.s32 %v79, %v81
    %v83 = vrot.slane %v69, %v82
    %v84 = vcombine.high %v76, %v76
    %v85 = vcombine.high %v83, %v83
    %vm94 = vcmask 1041408
    %v95 = vsel %vm94, %v59, 0.0
    %v96 = vsel %vm94, %v67, 0.0
    %v97 = vadd.f32 %v95, %v96
    %v98 = vsel %vm94, %v66, 0.0
    %v99 = vadd.f32 %v97, %v98
    %v100 = vsel %vm94, %v68, 0.0
    %v101 = vadd.f32 %v99, %v100
    %v102 = vsel %vm94, %v76, 0.0
    %v103 = vadd.f32 %v101, %v102
    %v104 = vsel %vm94, %v84, 0.0
    %v105 = vadd.f32 %v103, %v104
    %v106 = vsel %vm94, %v83, 0.0
    %v107 = vadd.f32 %v105, %v106
    %v108 = vsel %vm94, %v85, 0.0
    %v109 = vadd.f32 %v107, %v108
    %110 = vadd.xlane.f32.xlu0 %v109
    %v111 = vpop.xlane.xlu0 %110
    %v112 = vadd.f32 %v47, %v111
    %vm113 = vcmask 1024
    %114 = vst.msk [vmem:[#allocation2] sm:$0x3] %vm113, %v112
    %v115 = vld [vmem:[#allocation3] sm:$0x3]
    %v116 = vmul.f32 %v43, %v43
    %v117 = vmul.f32 %v44, %v44
    %v120 = vcombine.high %v116, %v116
    %v122 = vunpack.c.l.s4 1983009808
    %v123 = vunpack.c.0.s8 %v122
    %v124 = vlaneseq
    %v125 = vshrl.u32 %v124, 7
    %v126 = vsub.s32 %v123, %v125
    %v127 = vrot.slane %v116, %v126
    %v129 = vunpack.c.l.s4 1983009808
    %v130 = vunpack.c.0.s8 %v129
    %v131 = vlaneseq
    %v132 = vshrl.u32 %v131, 7
    %v133 = vsub.s32 %v130, %v132
    %v134 = vrot.slane %v120, %v133
    %v135 = vcombine.high %v127, %v127
    %v136 = vcombine.high %v134, %v134
    %v137 = vcombine.high %v117, %v117
    %v139 = vunpack.c.l.s4 1983009808
    %v140 = vunpack.c.0.s8 %v139
    %v141 = vlaneseq
    %v142 = vshrl.u32 %v141, 7
    %v143 = vsub.s32 %v140, %v142
    %v144 = vrot.slane %v117, %v143
    %v146 = vunpack.c.l.s4 1983009808
    %v147 = vunpack.c.0.s8 %v146
    %v148 = vlaneseq
    %v149 = vshrl.u32 %v148, 7
    %v150 = vsub.s32 %v147, %v149
    %v151 = vrot.slane %v137, %v150
    %v152 = vcombine.high %v144, %v144
    %v153 = vcombine.high %v151, %v151
    %v162 = vsel %vm94, %v127, 0.0
    %v163 = vsel %vm94, %v135, 0.0
    %v164 = vadd.f32 %v162, %v163
    %v165 = vsel %vm94, %v134, 0.0
    %v166 = vadd.f32 %v164, %v165
    %v167 = vsel %vm94, %v136, 0.0
    %v168 = vadd.f32 %v166, %v167
    %v169 = vsel %vm94, %v144, 0.0
    %v170 = vadd.f32 %v168, %v169
    %v171 = vsel %vm94, %v152, 0.0
    %v172 = vadd.f32 %v170, %v171
    %v173 = vsel %vm94, %v151, 0.0
    %v174 = vadd.f32 %v172, %v173
    %v175 = vsel %vm94, %v153, 0.0
    %v176 = vadd.f32 %v174, %v175
    %177 = vadd.xlane.f32.xlu0 %v176
    %v178 = vpop.xlane.xlu0 %177
    %v179 = vadd.f32 %v115, %v178
    %180 = vst.msk [vmem:[#allocation3] sm:$0x3] %vm113, %v179
    %v181 = vld [vmem:[#allocation4] sm:$0x3]
    %v182 = vmul.f32 %v45, %v45
    %v183 = vmul.f32 %v46, %v46
    %v186 = vcombine.high %v182, %v182
    %v188 = vunpack.c.l.s4 1983009808
    %v189 = vunpack.c.0.s8 %v188
    %v190 = vlaneseq
    %v191 = vshrl.u32 %v190, 7
    %v192 = vsub.s32 %v189, %v191
    %v193 = vrot.slane %v182, %v192
    %v195 = vunpack.c.l.s4 1983009808
    %v196 = vunpack.c.0.s8 %v195
    %v197 = vlaneseq
    %v198 = vshrl.u32 %v197, 7
    %v199 = vsub.s32 %v196, %v198
    %v200 = vrot.slane %v186, %v199
    %v201 = vcombine.high %v193, %v193
    %v202 = vcombine.high %v200, %v200
    %v203 = vcombine.high %v183, %v183
    %v205 = vunpack.c.l.s4 1983009808
    %v206 = vunpack.c.0.s8 %v205
    %v207 = vlaneseq
    %v208 = vshrl.u32 %v207, 7
    %v209 = vsub.s32 %v206, %v208
    %v210 = vrot.slane %v183, %v209
    %v212 = vunpack.c.l.s4 1983009808
    %v213 = vunpack.c.0.s8 %v212
    %v214 = vlaneseq
    %v215 = vshrl.u32 %v214, 7
    %v216 = vsub.s32 %v213, %v215
    %v217 = vrot.slane %v203, %v216
    %v218 = vcombine.high %v210, %v210
    %v219 = vcombine.high %v217, %v217
    %v228 = vsel %vm94, %v193, 0.0
    %v229 = vsel %vm94, %v201, 0.0
    %v230 = vadd.f32 %v228, %v229
    %v231 = vsel %vm94, %v200, 0.0
    %v232 = vadd.f32 %v230, %v231
    %v233 = vsel %vm94, %v202, 0.0
    %v234 = vadd.f32 %v232, %v233
    %v235 = vsel %vm94, %v210, 0.0
    %v236 = vadd.f32 %v234, %v235
    %v237 = vsel %vm94, %v218, 0.0
    %v238 = vadd.f32 %v236, %v237
    %v239 = vsel %vm94, %v217, 0.0
    %v240 = vadd.f32 %v238, %v239
    %v241 = vsel %vm94, %v219, 0.0
    %v242 = vadd.f32 %v240, %v241
    %243 = vadd.xlane.f32.xlu0 %v242
    %v244 = vpop.xlane.xlu0 %243
    %v245 = vadd.f32 %v181, %v244
    %246 = vst.msk [vmem:[#allocation4] sm:$0x3] %vm113, %v245
    // Predicated region
    $region22: #{tpu_custom_call.1} parent=1 // pred_check
      %p247 = pneg %p35
    $region23: #{tpu_custom_call.1} parent=1 // pred_check_branch
      %249 = sbr.rel (%p247) target = $region25
    $region24: #{tpu_custom_call.1} parent=1 // pred_region
      %v250 = vld [vmem:[#allocation3] sm:$0x3]
      %v251 = vmax.f32 %v250, 1e-24
      %v252 = vrsqrt.pop %v251
      %v253 = vld [vmem:[#allocation4] sm:$0x3]
      %v254 = vmax.f32 %v253, 1e-24
      %v255 = vrsqrt.pop %v254
      %v256 = vld [vmem:[#allocation2] sm:$0x3]
      %v257 = vmul.f32 %v256, %v252
      %v258 = vmul.f32 %v257, %v255
      %259 = vst.msk [vmem:[%s2] sm:$0x3] %vm113, %v258
    $region25: #{tpu_custom_call.1} parent=1 // pred_fallthru
      _
    // Predicated region
    $region26: #{tpu_custom_call.1} parent=1 // pred_check
      _
    $region27: #{tpu_custom_call.1} parent=1 // pred_check_branch
      %261 = sbr.rel (0) target = $region29
    $region28: #{tpu_custom_call.1} parent=1 // pred_region
      _
    $region29: #{tpu_custom_call.1} parent=1 // pred_fallthru
      _
    // Predicated region
    $region30: #{tpu_custom_call.1} parent=1 // pred_check
      _
    $region31: #{tpu_custom_call.1} parent=1 // pred_check_branch
      %263 = sbr.rel (0) target = $region33
    $region32: #{tpu_custom_call.1} parent=1 // pred_region
      _
    $region33: #{tpu_custom_call.1} parent=1 // pred_fallthru
      _
    %264 = vsyncpa [#allocation6], 1
    %265 = vsyncpa [#allocation8], 1

</llo_original>
